<compile_context>
chip_gen: v7x
topology: tpu7x:2x2x1
jax: 0.10.0
libtpu: 0.0.40
codegen_flags: <defaults>
</compile_context>

<pallas_src>
import jax
import jax.numpy as jnp
from jax.experimental import pallas as pl
from jax.experimental.pallas import tpu as pltpu

INPUT_CHANNELS = 4
HIDDEN_CHANNELS = 32

LANE = 128                                   # one gate per 128-lane block
K_IN = INPUT_CHANNELS + HIDDEN_CHANNELS      # 36 contraction rows (x on top, h below)
UH_ROW = 40                                  # sublane-tile-aligned start of Uh block
BIAS_ROW = 72                                # sublane-tile-aligned bias row
W_ROWS = 80                                  # packed slab rows (multiple of 8)
BLOCK_B = 128                                # batch rows per grid step


def pack_params(wx, wh, uh, b):
    """Pack all GRU-ODE parameters into a single (80, 384) f32 slab.

    rows [0, I+H)   lanes [g*128, g*128+H): fused input->gate weights for g in
                    {r, z, g}; x rows on top, h rows below.  The h->g block is
                    zero because the hidden state reaches the g gate via Uh(r*h).
    rows [40, 72)   lanes [0, H): Uh (g-gate recurrent weight).
    row  72         lanes [g*128, g*128+H): gate biases.
    """
    I, H = INPUT_CHANNELS, HIDDEN_CHANNELS
    w = jnp.zeros((W_ROWS, 3 * LANE), jnp.float32)
    for gate in range(3):
        w = w.at[:I, gate * LANE:gate * LANE + H].set(
            wx[:, gate * H:(gate + 1) * H])
        w = w.at[BIAS_ROW, gate * LANE:gate * LANE + H].set(
            b[0, gate * H:(gate + 1) * H])
    for gate in range(2):  # r and z gates take h directly; g gate does not
        w = w.at[I:I + H, gate * LANE:gate * LANE + H].set(
            wh[:, gate * H:(gate + 1) * H])
    w = w.at[UH_ROW:UH_ROW + H, 0:H].set(uh)
    return w


def converter_kernel(z_ref, w_ref, out_ref):
    I, H, L = INPUT_CHANNELS, HIDDEN_CHANNELS, LANE

    z = z_ref[...]                                             # (TB, I+H)
    lane = jax.lax.broadcasted_iota(jnp.int32, z.shape, 1)
    # clamp(-1, 1) applies to the hidden lanes only; x lanes pass through.
    zm = jnp.where(lane < I, z, jnp.clip(z, -1.0, 1.0))
    h = zm[:, I:I + H]                                         # clamped h

    # Single fused gate matmul (K = I+H); gates land in separate 128-lane
    # blocks, bias folded in via a broadcast row from the same slab.
    gates = jnp.dot(zm, w_ref[0:I + H, :],
                    preferred_element_type=jnp.float32)        # (TB, 3*128)
    gates = gates + w_ref[BIAS_ROW:BIAS_ROW + 1, :]            # (1, 384) bcast

    r = jax.nn.sigmoid(gates[:, 0:H])
    zg = jax.nn.sigmoid(gates[:, L:L + H])
    g = jnp.tanh(gates[:, 2 * L:2 * L + H]
                 + jnp.dot(r * h, w_ref[UH_ROW:UH_ROW + H, 0:H],
                           preferred_element_type=jnp.float32))

    out_ref[...] = (1.0 - zg) * (g - h)                        # (TB, H)


def continuous_rnn_converter_g(z, w_packed, *, block_b=BLOCK_B):
    B = z.shape[0]
    nb = pl.cdiv(B, block_b)
    b_pad = nb * block_b
    if b_pad != B:                      # pad batch to a whole number of blocks
        z = jnp.pad(z, ((0, b_pad - B), (0, 0)))

    out = pl.pallas_call(
        converter_kernel,
        out_shape=jax.ShapeDtypeStruct((b_pad, HIDDEN_CHANNELS), jnp.float32),
        grid=(nb,),
        in_specs=[
            pl.BlockSpec((block_b, K_IN), lambda i: (i, 0)),      # batch block
            pl.BlockSpec((W_ROWS, 3 * LANE), lambda i: (0, 0)),   # resident weights
        ],
        out_specs=pl.BlockSpec((block_b, HIDDEN_CHANNELS), lambda i: (i, 0)),
        compiler_params=pltpu.CompilerParams(
            dimension_semantics=("parallel",)),                   # 2x on v7x
    )(z, w_packed)

    return out[:B] if b_pad != B else out


def reference_forward(z, wx, wh, uh, b):
    I, H = INPUT_CHANNELS, HIDDEN_CHANNELS
    hp = jax.lax.Precision.HIGHEST
    x = z[:, :I]
    h = jnp.clip(z[:, I:], -1.0, 1.0)
    gx = jnp.dot(x, wx, precision=hp)
    gh = jnp.dot(h, wh, precision=hp)
    r = jax.nn.sigmoid(gx[:, :H] + gh[:, :H] + b[:, :H])
    zg = jax.nn.sigmoid(gx[:, H:2 * H] + gh[:, H:2 * H] + b[:, H:2 * H])
    g = jnp.tanh(gx[:, 2 * H:] + jnp.dot(r * h, uh, precision=hp) + b[:, 2 * H:])
    return (1.0 - zg) * (g - h)


if __name__ == "__main__":
    I, H = INPUT_CHANNELS, HIDDEN_CHANNELS
    B = 256  # two 128-row batch blocks -> exercises the "parallel" grid axis

    key = jax.random.PRNGKey(0)
    kz, kwx, kwh, kuh, kb = jax.random.split(key, 5)

    # deterministic synthetic inputs / parameters (no checkpoint)
    z = jax.random.normal(kz, (B, I + H), dtype=jnp.float32)
    wx = 0.1 * jax.random.normal(kwx, (I, 3 * H), dtype=jnp.float32)
    wh = 0.1 * jax.random.normal(kwh, (H, 2 * H), dtype=jnp.float32)
    uh = 0.1 * jax.random.normal(kuh, (H, H), dtype=jnp.float32)
    b = 0.1 * jax.random.normal(kb, (1, 3 * H), dtype=jnp.float32)

    # `out_base` buffer from __init__ (registered but unused by this `_g` forward).
    out_base = jnp.zeros((I + H, I), jnp.float32).at[
        jnp.arange(I), jnp.arange(I)].set(1.0)
    del out_base

    w_packed = pack_params(wx, wh, uh, b)

    out = continuous_rnn_converter_g(z, w_packed)
    out = jax.block_until_ready(out)

    ref = reference_forward(z, wx, wh, uh, b)
    assert out.shape == (B, H)
    assert jnp.allclose(out, ref, atol=1e-4, rtol=1e-4), "mismatch vs reference"

    print("KERNEL_OK")
</pallas_src>

<mosaic_0001>
module attributes {stable_mosaic.version = 11 : i64} {
  func.func @converter_kernel(%arg0: i32, %arg1: memref<128x36xf32, #tpu.memory_space<vmem>>, %arg2: memref<80x384xf32, #tpu.memory_space<vmem>>, %arg3: memref<128x32xf32, #tpu.memory_space<vmem>>) attributes {dimension_semantics = [#tpu.dimension_semantics<parallel>], iteration_bounds = array<i64: 2>, scalar_prefetch = 0 : i64, scratch_operands = 0 : i64, tpu.core_type = #tpu.core_type<tc>, window_params = [{transform_indices = @transform_0, window_bounds = array<i64: 128, 36>}, {pipeline_mode = #tpu.pipeline_mode<synchronous>, transform_indices = @transform_1, window_bounds = array<i64: 80, 384>}, {transform_indices = @transform_2, window_bounds = array<i64: 128, 32>}]} {
    %c0 = arith.constant 0 : index
    %c0_0 = arith.constant 0 : index
    %0 = vector.load %arg1[%c0, %c0_0] : memref<128x36xf32, #tpu.memory_space<vmem>>, vector<128x36xf32>
    %1 = tpu.iota {dimensions = array<i32: 1>} : vector<128x36xi32>
    %c4_i32 = arith.constant 4 : i32
    %2 = vector.broadcast %c4_i32 : i32 to vector<128x36xi32>
    %3 = arith.cmpi slt, %1, %2 : vector<128x36xi32>
    %cst = arith.constant -1.000000e+00 : f32
    %cst_1 = arith.constant 1.000000e+00 : f32
    %4 = vector.broadcast %cst : f32 to vector<128x36xf32>
    %5 = arith.maximumf %4, %0 : vector<128x36xf32>
    %6 = vector.broadcast %cst_1 : f32 to vector<128x36xf32>
    %7 = arith.minimumf %6, %5 : vector<128x36xf32>
    %8 = arith.select %3, %0, %7 : vector<128x36xi1>, vector<128x36xf32>
    %9 = vector.extract_strided_slice %8 {offsets = [0, 4], sizes = [128, 32], strides = [1, 1]} : vector<128x36xf32> to vector<128x32xf32>
    %c0_2 = arith.constant 0 : index
    %c0_3 = arith.constant 0 : index
    %10 = vector.load %arg2[%c0_2, %c0_3] : memref<80x384xf32, #tpu.memory_space<vmem>>, vector<36x384xf32>
    %cst_4 = arith.constant dense<0.000000e+00> : vector<128x384xf32>
    %11 = tpu.matmul %8, %10, %cst_4 {dimension_numbers = #tpu.dot_dimension_numbers<[1], [0], [0], [1], [0, 0, 1, 1], [], []>} : vector<128x36xf32>, vector<36x384xf32>, vector<128x384xf32> -> vector<128x384xf32>
    %c72 = arith.constant 72 : index
    %c0_5 = arith.constant 0 : index
    %12 = vector.load %arg2[%c72, %c0_5] : memref<80x384xf32, #tpu.memory_space<vmem>>, vector<1x384xf32>
    %13 = vector.broadcast %12 : vector<1x384xf32> to vector<128x384xf32>
    %14 = arith.addf %11, %13 : vector<128x384xf32>
    %15 = vector.extract_strided_slice %14 {offsets = [0, 0], sizes = [128, 32], strides = [1, 1]} : vector<128x384xf32> to vector<128x32xf32>
    %16 = arith.negf %15 : vector<128x32xf32>
    %17 = math.exp %16 : vector<128x32xf32>
    %cst_6 = arith.constant 1.000000e+00 : f32
    %18 = vector.broadcast %cst_6 : f32 to vector<128x32xf32>
    %19 = arith.addf %18, %17 : vector<128x32xf32>
    %20 = arith.divf %18, %19 : vector<128x32xf32>
    %21 = vector.extract_strided_slice %14 {offsets = [0, 128], sizes = [128, 32], strides = [1, 1]} : vector<128x384xf32> to vector<128x32xf32>
    %22 = arith.negf %21 : vector<128x32xf32>
    %23 = math.exp %22 : vector<128x32xf32>
    %cst_7 = arith.constant 1.000000e+00 : f32
    %24 = vector.broadcast %cst_7 : f32 to vector<128x32xf32>
    %25 = arith.addf %24, %23 : vector<128x32xf32>
    %26 = arith.divf %24, %25 : vector<128x32xf32>
    %27 = vector.extract_strided_slice %14 {offsets = [0, 256], sizes = [128, 32], strides = [1, 1]} : vector<128x384xf32> to vector<128x32xf32>
    %28 = arith.mulf %20, %9 : vector<128x32xf32>
    %c40 = arith.constant 40 : index
    %c0_8 = arith.constant 0 : index
    %29 = vector.load %arg2[%c40, %c0_8] : memref<80x384xf32, #tpu.memory_space<vmem>>, vector<32x32xf32>
    %cst_9 = arith.constant dense<0.000000e+00> : vector<128x32xf32>
    %30 = tpu.matmul %28, %29, %cst_9 {dimension_numbers = #tpu.dot_dimension_numbers<[1], [0], [0], [1], [0, 0, 1, 1], [], []>} : vector<128x32xf32>, vector<32x32xf32>, vector<128x32xf32> -> vector<128x32xf32>
    %31 = arith.addf %27, %30 : vector<128x32xf32>
    %32 = math.tanh %31 : vector<128x32xf32>
    %cst_10 = arith.constant 1.000000e+00 : f32
    %33 = vector.broadcast %cst_10 : f32 to vector<128x32xf32>
    %34 = arith.subf %33, %26 : vector<128x32xf32>
    %35 = arith.subf %32, %9 : vector<128x32xf32>
    %36 = arith.mulf %34, %35 : vector<128x32xf32>
    %c0_11 = arith.constant 0 : index
    %c0_12 = arith.constant 0 : index
    %37 = vector.load %arg3[%c0_11, %c0_12] : memref<128x32xf32, #tpu.memory_space<vmem>>, vector<128x32xf32>
    tpu.vector_store %arg3[%c0_11, %c0_12], %36 {strides = array<i32>} : memref<128x32xf32, #tpu.memory_space<vmem>>, vector<128x32xf32>,
    return
  }
  func.func @transform_0(%arg0: i32) -> (i32, i32) {
    %c0_i32 = arith.constant 0 : i32
    %c0_i32_0 = arith.constant 0 : i32
    return %arg0, %c0_i32 : i32, i32
  }
  func.func @transform_1(%arg0: i32) -> (i32, i32) {
    %c0_i32 = arith.constant 0 : i32
    %c0_i32_0 = arith.constant 0 : i32
    %c0_i32_1 = arith.constant 0 : i32
    return %c0_i32, %c0_i32_0 : i32, i32
  }
  func.func @transform_2(%arg0: i32) -> (i32, i32) {
    %c0_i32 = arith.constant 0 : i32
    %c0_i32_0 = arith.constant 0 : i32
    return %arg0, %c0_i32 : i32, i32
  }
}

</mosaic_0001>

<llo_original>
// kernel: tpu_custom_call.1
$region0: #{tpu_custom_call.1}
  #allocation0 [shape = 'u32[]', space=smem, size = 0x4, offset = 0x4, fixed_abs, tag = 'smem constant byte address 0x4 - core index']
  #allocation1 [shape = 'u32[144,128]{1,0:T(1,128)}', space=vmem, size = 0x12000, scoped, tag = 'internal scratch']
  %s0 = inlined_call_operand.vmem [shape: f32[256,36], index: 0, kind: input, shape index: {}]
  %s1 = inlined_call_operand.vmem [shape: f32[80,384], index: 1, kind: input, shape index: {}]
  %s2 = inlined_call_operand.vmem [shape: f32[256,32], index: 2, kind: output, shape index: {}]
  %s3 = sld [smem:[#allocation0]]
  $region41: #{tpu_custom_call.1} parent=0
    _
  %s5 = ssub.s32 1, %s3
  %s6 = scalar_select 0, %s5, %s3
  loop: start=0, step=1, limit=4
  $region2: #{tpu_custom_call.1} parent=0 // loop_pre_header
    _
  $region3: #{tpu_custom_call.1} parent=0 // loop_header
    %s8 = sphi 0, %s12
    %p9 = scmp.ge.s32.totalorder %s8, 4
    %s18 = sphi 0, %s20
    %s21 = sphi 0, %s18
    %s22 = sphi 0, %s21
    %s38 = sphi 0, %s22
    %s42 = sphi 0, %s42
    %s44 = sphi 0, %s42
    %s45 = sphi 0, %s44
    %s59 = sphi 0, %s45
    %s65 = sphi 0, %s67
    %s68 = sphi 0, %s65
    %s69 = sphi 0, %s68
    %s85 = sphi 0, %s69
  $region4: #{tpu_custom_call.1} parent=0 // loop_header_branch
    %11 = sbr.rel (%p9) target = $region8
  $region5: #{tpu_custom_call.1} parent=0 // loop_body
    %s13 = ssub.s32 %s8, 1
    %s14 = ssub.s32 %s8, 2
    %s15 = sadd.s32 %s8, 1
    %s16 = ssub.s32 %s8, %s15
    %p17 = scmp.eq.s32.totalorder %s16, 0
    %s19 = sadd.s32 %s18, 1
    %s20 = scalar_select %p17, %s18, %s19
    %p23 = pneg %p17
    %p24 = scmp.eq.s32.totalorder %s8, 1
    %p25 = por %p23, %p24
    %p26 = scmp.ne.s32.totalorder %s18, %s21
    %p27 = scmp.eq.s32.totalorder %s8, 0
    %p28 = por %p26, %p27
    %p29 = scmp.ne.s32.totalorder %s18, %s21
    %p30 = scmp.eq.s32.totalorder %s13, 1
    %p31 = por %p29, %p30
    %p32 = scmp.ne.s32.totalorder %s21, %s22
    %p33 = scmp.eq.s32.totalorder %s13, 0
    %p34 = por %p32, %p33
    %p35 = scmp.ne.s32.totalorder %s21, %s22
    %p36 = scmp.eq.s32.totalorder %s14, 1
    %p37 = por %p35, %p36
    %p39 = scmp.ne.s32.totalorder %s22, %s38
    %p40 = scmp.eq.s32.totalorder %s14, 0
    %p41 = por %p39, %p40
    %s43 = sadd.s32 %s42, 1
    %p46 = scmp.eq.s32.totalorder %s8, 1
    %p47 = scmp.ne.s32.totalorder %s42, %s44
    %p48 = scmp.eq.s32.totalorder %s8, 0
    %p49 = por %p47, %p48
    %p50 = scmp.ne.s32.totalorder %s42, %s44
    %p51 = scmp.eq.s32.totalorder %s13, 1
    %p52 = por %p50, %p51
    %p53 = scmp.ne.s32.totalorder %s44, %s45
    %p54 = scmp.eq.s32.totalorder %s13, 0
    %p55 = por %p53, %p54
    %p56 = scmp.ne.s32.totalorder %s44, %s45
    %p57 = scmp.eq.s32.totalorder %s14, 1
    %p58 = por %p56, %p57
    %p60 = scmp.ne.s32.totalorder %s45, %s59
    %p61 = scmp.eq.s32.totalorder %s14, 0
    %p62 = por %p60, %p61
    %s63 = ssub.s32 %s8, %s15
    %p64 = scmp.eq.s32.totalorder %s63, 0
    %s66 = sadd.s32 %s65, 1
    %s67 = scalar_select %p64, %s65, %s66
    %p70 = pneg %p64
    %p71 = scmp.eq.s32.totalorder %s8, 1
    %p72 = por %p70, %p71
    %p73 = scmp.ne.s32.totalorder %s65, %s68
    %p74 = scmp.eq.s32.totalorder %s8, 0
    %p75 = por %p73, %p74
    %p76 = scmp.ne.s32.totalorder %s65, %s68
    %p77 = scmp.eq.s32.totalorder %s13, 1
    %p78 = por %p76, %p77
    %p79 = scmp.ne.s32.totalorder %s68, %s69
    %p80 = scmp.eq.s32.totalorder %s13, 0
    %p81 = por %p79, %p80
    %p82 = scmp.ne.s32.totalorder %s68, %s69
    %p83 = scmp.eq.s32.totalorder %s14, 1
    %p84 = por %p82, %p83
    %p86 = scmp.ne.s32.totalorder %s69, %s85
    %p87 = scmp.eq.s32.totalorder %s14, 0
    %p88 = por %p86, %p87
    %p89 = scmp.le.s32.totalorder 1, %s8
    %p90 = scmp.lt.s32.totalorder %s8, 3
    %p91 = pnand %p89, %p90
    %p92 = pneg %p91
    // Predicated region
    $region9: #{tpu_custom_call.1} parent=5 // pred_check
      _
    $region10: #{tpu_custom_call.1} parent=5 // pred_check_branch
      %94 = sbr.rel (%p91) target = $region12
    $region11: #{tpu_custom_call.1} parent=5 // pred_region
      %s95 = ssub.s32 %s8, 1
      // Predicated region
      $region13: #{tpu_custom_call.1} parent=11 // pred_check
        %p96 = pneg %p55
      $region14: #{tpu_custom_call.1} parent=11 // pred_check_branch
        %98 = sbr.rel (%p96) target = $region16
      $region15: #{tpu_custom_call.1} parent=11 // pred_region
        _
      $region16: #{tpu_custom_call.1} parent=11 // pred_fallthru
        _
    $region12: #{tpu_custom_call.1} parent=5 // pred_fallthru
      _
    %p99 = scmp.lt.s32.totalorder %s8, 2
    // Predicated region
    $region17: #{tpu_custom_call.1} parent=5 // pred_check
      %p100 = pneg %p99
    $region18: #{tpu_custom_call.1} parent=5 // pred_check_branch
      %102 = sbr.rel (%p100) target = $region20
    $region19: #{tpu_custom_call.1} parent=5 // pred_region
      // Predicated region
      $region21: #{tpu_custom_call.1} parent=19 // pred_check
        %p103 = pneg %p28
      $region22: #{tpu_custom_call.1} parent=19 // pred_check_branch
        %105 = sbr.rel (%p103) target = $region24
      $region23: #{tpu_custom_call.1} parent=19 // pred_region
        %s106 = smul.u32 16, %s8
        %p107 = scmp.lt.s32.totalorder %s106, 31
        %s108 = scalar_select %p107, %s106, 31
        %s109 = smul.addr %s108, 8
        %s110 = scalar_lea.vmem %s0, %s109
        %s111 = smul.u32 16, %s8
      $region24: #{tpu_custom_call.1} parent=19 // pred_fallthru
        _
    $region20: #{tpu_custom_call.1} parent=5 // pred_fallthru
      _
    %p112 = scmp.le.s32.totalorder 1, %s8
    %p113 = scmp.lt.s32.totalorder %s8, 3
    %p114 = pnand %p112, %p113
    %p115 = pneg %p114
    // Predicated region
    $region25: #{tpu_custom_call.1} parent=5 // pred_check
      _
    $region26: #{tpu_custom_call.1} parent=5 // pred_check_branch
      %117 = sbr.rel (%p114) target = $region28
    $region27: #{tpu_custom_call.1} parent=5 // pred_region
      %s118 = ssub.s32 %s8, 1
      %s119 = smul.u32 16, %s13
      %p120 = scmp.lt.s32.totalorder %s119, 31
      %s121 = scalar_select %p120, %s119, 31
      %s122 = smul.addr %s121, 8
      %s123 = scalar_lea.vmem %s0, %s122
      %p124 = pneg %p34
      %p125 = pneg %p31
      %p126 = pneg %p55
      %p127 = pneg %p52
      %p128 = pneg %p81
      %p129 = pneg %p78
      %s130 = smul.u32 16, %s13
      %p131 = scmp.lt.s32.totalorder %s130, 31
      %s132 = scalar_select %p131, %s130, 31
      %s133 = smul.addr %s132, 8
      %s134 = scalar_lea.vmem %s2, %s133
      %s135 = smul.u32 16, %s13
      %p136 = scmp.lt.s32.totalorder %s135, 31
      %s137 = scalar_select %p136, %s135, 31
      %s138 = smul.addr %s137, 8
      %s139 = scalar_lea.vmem %s0, %s138
      %s140 = smul.u32 16, %s13
      %s141 = smul.u32 16, %s13
      %p142 = scmp.lt.s32.totalorder %s141, 31
      %s143 = scalar_select %p142, %s141, 31
      %s144 = smul.addr %s143, 8
      %s145 = scalar_lea.vmem %s2, %s144
      %s146 = smul.u32 16, %s13
      %v147 = vld [vmem:[%s139] sm:$0xff]
      %v148 = vld [vmem:[%s139 + $0x8] sm:$0xff]
      %v149 = vld [vmem:[%s139 + $0x10] sm:$0xff]
      %v150 = vld [vmem:[%s139 + $0x18] sm:$0xff]
      %v151 = vld [vmem:[%s139 + $0x20] sm:$0xff]
      %v152 = vld [vmem:[%s139 + $0x28] sm:$0xff]
      %v153 = vld [vmem:[%s139 + $0x30] sm:$0xff]
      %v154 = vld [vmem:[%s139 + $0x38] sm:$0xff]
      %v155 = vld [vmem:[%s139 + $0x40] sm:$0xff]
      %v156 = vld [vmem:[%s139 + $0x48] sm:$0xff]
      %v157 = vld [vmem:[%s139 + $0x50] sm:$0xff]
      %v158 = vld [vmem:[%s139 + $0x58] sm:$0xff]
      %v159 = vld [vmem:[%s139 + $0x60] sm:$0xff]
      %v160 = vld [vmem:[%s139 + $0x68] sm:$0xff]
      %v161 = vld [vmem:[%s139 + $0x70] sm:$0xff]
      %v162 = vld [vmem:[%s139 + $0x78] sm:$0xff]
      %v163 = vlaneseq
      %v164 = vand.u32 %v163, 127
      %vm165 = vcmp.lt.s32.totalorder %v164, 4
      %v166 = vmax.f32 %v147, -1.0
      %v167 = vmax.f32 %v148, -1.0
      %v168 = vmax.f32 %v149, -1.0
      %v169 = vmax.f32 %v150, -1.0
      %v170 = vmax.f32 %v151, -1.0
      %v171 = vmax.f32 %v152, -1.0
      %v172 = vmax.f32 %v153, -1.0
      %v173 = vmax.f32 %v154, -1.0
      %v174 = vmax.f32 %v155, -1.0
      %v175 = vmax.f32 %v156, -1.0
      %v176 = vmax.f32 %v157, -1.0
      %v177 = vmax.f32 %v158, -1.0
      %v178 = vmax.f32 %v159, -1.0
      %v179 = vmax.f32 %v160, -1.0
      %v180 = vmax.f32 %v161, -1.0
      %v181 = vmax.f32 %v162, -1.0
      %v182 = vmin.f32 %v166, 1.0
      %v183 = vmin.f32 %v167, 1.0
      %v184 = vmin.f32 %v168, 1.0
      %v185 = vmin.f32 %v169, 1.0
      %v186 = vmin.f32 %v170, 1.0
      %v187 = vmin.f32 %v171, 1.0
      %v188 = vmin.f32 %v172, 1.0
      %v189 = vmin.f32 %v173, 1.0
      %v190 = vmin.f32 %v174, 1.0
      %v191 = vmin.f32 %v175, 1.0
      %v192 = vmin.f32 %v176, 1.0
      %v193 = vmin.f32 %v177, 1.0
      %v194 = vmin.f32 %v178, 1.0
      %v195 = vmin.f32 %v179, 1.0
      %v196 = vmin.f32 %v180, 1.0
      %v197 = vmin.f32 %v181, 1.0
      %v198 = vsel %vm165, %v147, %v182
      %v199 = vsel %vm165, %v148, %v183
      %v200 = vsel %vm165, %v149, %v184
      %v201 = vsel %vm165, %v150, %v185
      %v202 = vsel %vm165, %v151, %v186
      %v203 = vsel %vm165, %v152, %v187
      %v204 = vsel %vm165, %v153, %v188
      %v205 = vsel %vm165, %v154, %v189
      %v206 = vsel %vm165, %v155, %v190
      %v207 = vsel %vm165, %v156, %v191
      %v208 = vsel %vm165, %v157, %v192
      %v209 = vsel %vm165, %v158, %v193
      %v210 = vsel %vm165, %v159, %v194
      %v211 = vsel %vm165, %v160, %v195
      %v212 = vsel %vm165, %v161, %v196
      %v213 = vsel %vm165, %v162, %v197
      %v214 = vld [vmem:[%s1] sm:$0xff]
      %v215 = vld [vmem:[%s1 + $0x8] sm:$0xff]
      %v216 = vld [vmem:[%s1 + $0x10] sm:$0xff]
      %v217 = vld [vmem:[%s1 + $0x18] sm:$0xff]
      %v218 = vld [vmem:[%s1 + $0x20] sm:$0xff]
      %v219 = vld [vmem:[%s1 + $0x28] sm:$0xff]
      %v220 = vld [vmem:[%s1 + $0x30] sm:$0xff]
      %v221 = vld [vmem:[%s1 + $0x38] sm:$0xff]
      %v222 = vld [vmem:[%s1 + $0x40] sm:$0xff]
      %v223 = vld [vmem:[%s1 + $0x48] sm:$0xff]
      %v224 = vld [vmem:[%s1 + $0x50] sm:$0xff]
      %v225 = vld [vmem:[%s1 + $0x58] sm:$0xff]
      %v226 = vld [vmem:[%s1 + $0x60] sm:$0xf]
      %v227 = vld [vmem:[%s1 + $0x68] sm:$0xf]
      %v228 = vld [vmem:[%s1 + $0x70] sm:$0xf]
      %s229 = scalar_lea.vmem %s1, 216
      %v230 = vld [vmem:[%s229] ss:$8 sm:$0x7]
      %v232 = vlaneseq
      %v233 = vshrl.u32 %v232, 7
      %v234 = vsub.s32 0, %v233
      %v235 = vrot.slane %v230, %v234
      %v236 = vlaneseq
      %v237 = vshrl.u32 %v236, 7
      %v238 = vsub.s32 1, %v237
      %v239 = vrot.slane %v230, %v238
      %v240 = vlaneseq
      %v241 = vshrl.u32 %v240, 7
      %v242 = vsub.s32 2, %v241
      %v243 = vrot.slane %v230, %v242
      %vm247 = vcmask 293888
      %v249 = vsel %vm247, %v198, 0
      %v252 = vsel %vm247, %v199, 0
      %v255 = vsel %vm247, %v200, 0
      %v258 = vsel %vm247, %v201, 0
      %v261 = vsel %vm247, %v202, 0
      %v264 = vsel %vm247, %v203, 0
      %v267 = vsel %vm247, %v204, 0
      %v270 = vsel %vm247, %v205, 0
      %v273 = vsel %vm247, %v206, 0
      %v276 = vsel %vm247, %v207, 0
      %v279 = vsel %vm247, %v208, 0
      %v282 = vsel %vm247, %v209, 0
      %v285 = vsel %vm247, %v210, 0
      %v288 = vsel %vm247, %v211, 0
      %v291 = vsel %vm247, %v212, 0
      %v294 = vsel %vm247, %v213, 0
      %vm296 = vcmask 1043456
      %v298 = vsel %vm296, %v226, 0
      %v301 = vsel %vm296, %v227, 0
      %v304 = vsel %vm296, %v228, 0
      %306 = vmatprep.subr.mxu0 %v215
      %307 = vmatpush1.msra.mxu0 %v214
      %308 = vmatprep.subr.mxu0 %v218
      %309 = vmatpush1.msra.mxu0 %v217
      %310 = vmatprep.subr.mxu0 %v221
      %311 = vmatpush1.msra.mxu0 %v220
      %312 = vmatprep.subr.mxu0 %v224
      %313 = vmatpush1.msra.mxu0 %v223
      %314 = vmatprep.subr.mxu0 %v301
      %315 = vmatpush1.msra.mxu0 %v298
      %316 = vmatprep.subr.mxu0 0.0
      %317 = vmatpush1.msra.mxu0 0.0
      %318 = vmatprep.subr.mxu0 0.0
      %319 = vmatpush1.msra.mxu0 0.0
      %320 = vmatprep.subr.mxu0 0.0
      %321 = vmatpush1.msra.mxu0 0.0
      %322 = vmatprep.subr.mxu0 0.0
      %323 = vmatpush1.msra.mxu0 0.0
      %324 = vmatprep.subr.mxu0 0.0
      %325 = vmatpush1.msra.mxu0 0.0
      %326 = vmatprep.subr.mxu0 0.0
      %327 = vmatpush1.msra.mxu0 0.0
      %328 = vmatprep.subr.mxu0 0.0
      %329 = vmatpush1.msra.mxu0 0.0
      %330 = vmatprep.subr.mxu0 0.0
      %331 = vmatpush1.msra.mxu0 0.0
      %332 = vmatprep.subr.mxu0 0.0
      %333 = vmatpush1.msra.mxu0 0.0
      %334 = vmatprep.subr.mxu0 0.0
      %335 = vmatpush1.msra.mxu0 0.0
      %336 = vmatprep.subr.mxu0 0.0
      %337 = vmatpush1.msra.mxu0 0.0
      %338 = vmatprep.subr.mxu0 0.0
      %339 = vmatpush1.msra.mxu0 0.0
      %340 = vmatprep.subr.mxu0 0.0
      %341 = vmatpush1.msra.mxu0 0.0
      %342 = vmatprep.subr.mxu0 0.0
      %343 = vmatpush1.msra.mxu0 0.0
      %344 = vmatprep.subr.mxu0 0.0
      %345 = vmatpush1.msra.mxu0 0.0
      %346 = vmatprep.subr.mxu0 0.0
      %347 = vmatpush1.msra.mxu0 0.0
      %348 = vmatprep.subr.mxu0 0.0
      %349 = vmatpush1.msra.mxu0 0.0
      %350 = vmatprep.subr.mxu0 0.0
      %351 = vmatpush1.msra.mxu0 0.0
      %352 = vmatprep.subr.mxu0 0.0
      %353 = vmatpush1.msra.mxu0 0.0
      %354 = vmatprep.subr.mxu0 0.0
      %355 = vmatpush1.msra.mxu0 0.0
      %356 = vmatprep.subr.mxu0 0.0
      %357 = vmatpush1.msra.mxu0 0.0
      %358 = vmatprep.subr.mxu0 0.0
      %359 = vmatpush1.msra.mxu0 0.0
      %360 = vmatprep.subr.mxu0 0.0
      %361 = vmatpush1.msra.mxu0 0.0
      %362 = vmatprep.subr.mxu0 0.0
      %363 = vmatpush1.msra.mxu0 0.0
      %364 = vmatprep.subr.mxu0 0.0
      %365 = vmatpush1.msra.mxu0 0.0
      %366 = vmatprep.subr.mxu0 0.0
      %367 = vmatpush1.msra.mxu0 0.0
      %368 = vmatprep.subr.mxu0 0.0
      %369 = vmatpush1.msra.mxu0 0.0
      %370 = vmatprep.mubr.f32.mxu0 0.0
      %371 = vmatmul.mubr.f32.gmra.mrb[0].mxu0 %v249
      %v372 = vpop.f32.mrb[0].mxu0
      %v373 = vadd.f32 %v235, %v372
      %v374 = vpop.f32.mrb[0].mxu0
      %v375 = vadd.f32 %v239, %v374
      %376 = vmatprep.mubr.f32.mxu0 0.0
      %377 = vmatmul.mubr.f32.gmra.mrb[0].mxu0 %v252
      %v378 = vpop.f32.mrb[0].mxu0
      %v379 = vadd.f32 %v235, %v378
      %v380 = vpop.f32.mrb[0].mxu0
      %v381 = vadd.f32 %v239, %v380
      %382 = vmatprep.mubr.f32.mxu0 0.0
      %383 = vmatmul.mubr.f32.gmra.mrb[0].mxu0 %v255
      %v384 = vpop.f32.mrb[0].mxu0
      %v385 = vadd.f32 %v235, %v384
      %v386 = vpop.f32.mrb[0].mxu0
      %v387 = vadd.f32 %v239, %v386
      %388 = vmatprep.mubr.f32.mxu0 0.0
      %389 = vmatmul.mubr.f32.gmra.mrb[0].mxu0 %v258
      %v390 = vpop.f32.mrb[0].mxu0
      %v391 = vadd.f32 %v235, %v390
      %v392 = vpop.f32.mrb[0].mxu0
      %v393 = vadd.f32 %v239, %v392
      %394 = vmatprep.mubr.f32.mxu0 0.0
      %395 = vmatmul.mubr.f32.gmra.mrb[0].mxu0 %v261
      %v396 = vpop.f32.mrb[0].mxu0
      %v397 = vadd.f32 %v235, %v396
      %v398 = vpop.f32.mrb[0].mxu0
      %v399 = vadd.f32 %v239, %v398
      %400 = vmatprep.mubr.f32.mxu0 0.0
      %401 = vmatmul.mubr.f32.gmra.mrb[0].mxu0 %v264
      %v402 = vpop.f32.mrb[0].mxu0
      %v403 = vadd.f32 %v235, %v402
      %v404 = vpop.f32.mrb[0].mxu0
      %v405 = vadd.f32 %v239, %v404
      %406 = vmatprep.mubr.f32.mxu0 0.0
      %407 = vmatmul.mubr.f32.gmra.mrb[0].mxu0 %v267
      %v408 = vpop.f32.mrb[0].mxu0
      %v409 = vadd.f32 %v235, %v408
      %v410 = vpop.f32.mrb[0].mxu0
      %v411 = vadd.f32 %v239, %v410
      %412 = vmatprep.mubr.f32.mxu0 0.0
      %413 = vmatmul.mubr.f32.gmra.mrb[0].mxu0 %v270
      %v414 = vpop.f32.mrb[0].mxu0
      %v415 = vadd.f32 %v235, %v414
      %v416 = vpop.f32.mrb[0].mxu0
      %v417 = vadd.f32 %v239, %v416
      %418 = vmatprep.mubr.f32.mxu0 0.0
      %419 = vmatmul.mubr.f32.gmra.mrb[0].mxu0 %v273
      %v420 = vpop.f32.mrb[0].mxu0
      %v421 = vadd.f32 %v235, %v420
      %v422 = vpop.f32.mrb[0].mxu0
      %v423 = vadd.f32 %v239, %v422
      %424 = vmatprep.mubr.f32.mxu0 0.0
      %425 = vmatmul.mubr.f32.gmra.mrb[0].mxu0 %v276
      %v426 = vpop.f32.mrb[0].mxu0
      %v427 = vadd.f32 %v235, %v426
      %v428 = vpop.f32.mrb[0].mxu0
      %v429 = vadd.f32 %v239, %v428
      %430 = vmatprep.mubr.f32.mxu0 0.0
      %431 = vmatmul.mubr.f32.gmra.mrb[0].mxu0 %v279
      %v432 = vpop.f32.mrb[0].mxu0
      %v433 = vadd.f32 %v235, %v432
      %v434 = vpop.f32.mrb[0].mxu0
      %v435 = vadd.f32 %v239, %v434
      %436 = vmatprep.mubr.f32.mxu0 0.0
      %437 = vmatmul.mubr.f32.gmra.mrb[0].mxu0 %v282
      %v438 = vpop.f32.mrb[0].mxu0
      %v439 = vadd.f32 %v235, %v438
      %v440 = vpop.f32.mrb[0].mxu0
      %v441 = vadd.f32 %v239, %v440
      %442 = vmatprep.mubr.f32.mxu0 0.0
      %443 = vmatmul.mubr.f32.gmra.mrb[0].mxu0 %v285
      %v444 = vpop.f32.mrb[0].mxu0
      %v445 = vadd.f32 %v235, %v444
      %v446 = vpop.f32.mrb[0].mxu0
      %v447 = vadd.f32 %v239, %v446
      %448 = vmatprep.mubr.f32.mxu0 0.0
      %449 = vmatmul.mubr.f32.gmra.mrb[0].mxu0 %v288
      %v450 = vpop.f32.mrb[0].mxu0
      %v451 = vadd.f32 %v235, %v450
      %v452 = vpop.f32.mrb[0].mxu0
      %v453 = vadd.f32 %v239, %v452
      %454 = vmatprep.mubr.f32.mxu0 0.0
      %455 = vmatmul.mubr.f32.gmra.mrb[0].mxu0 %v291
      %v456 = vpop.f32.mrb[0].mxu0
      %v457 = vadd.f32 %v235, %v456
      %v458 = vpop.f32.mrb[0].mxu0
      %v459 = vadd.f32 %v239, %v458
      %460 = vmatprep.mubr.f32.mxu0 0.0
      %461 = vmatmul.mubr.f32.gmra.mrb[0].mxu0 %v294
      %v462 = vpop.f32.mrb[0].mxu0
      %v463 = vadd.f32 %v235, %v462
      %v464 = vpop.f32.mrb[0].mxu0
      %v465 = vadd.f32 %v239, %v464
      %466 = vdwg.mxu0
      %467 = vmatprep.subr.mxu0 0.0
      %468 = vmatpush1.msra.mxu0 %v216
      %469 = vmatprep.subr.mxu0 0.0
      %470 = vmatpush1.msra.mxu0 %v219
      %471 = vmatprep.subr.mxu0 0.0
      %472 = vmatpush1.msra.mxu0 %v222
      %473 = vmatprep.subr.mxu0 0.0
      %474 = vmatpush1.msra.mxu0 %v225
      %475 = vmatprep.subr.mxu0 0.0
      %476 = vmatpush1.msra.mxu0 %v304
      %477 = vmatprep.subr.mxu0 0.0
      %478 = vmatpush1.msra.mxu0 0.0
      %479 = vmatprep.subr.mxu0 0.0
      %480 = vmatpush1.msra.mxu0 0.0
      %481 = vmatprep.subr.mxu0 0.0
      %482 = vmatpush1.msra.mxu0 0.0
      %483 = vmatprep.subr.mxu0 0.0
      %484 = vmatpush1.msra.mxu0 0.0
      %485 = vmatprep.subr.mxu0 0.0
      %486 = vmatpush1.msra.mxu0 0.0
      %487 = vmatprep.subr.mxu0 0.0
      %488 = vmatpush1.msra.mxu0 0.0
      %489 = vmatprep.subr.mxu0 0.0
      %490 = vmatpush1.msra.mxu0 0.0
      %491 = vmatprep.subr.mxu0 0.0
      %492 = vmatpush1.msra.mxu0 0.0
      %493 = vmatprep.subr.mxu0 0.0
      %494 = vmatpush1.msra.mxu0 0.0
      %495 = vmatprep.subr.mxu0 0.0
      %496 = vmatpush1.msra.mxu0 0.0
      %497 = vmatprep.subr.mxu0 0.0
      %498 = vmatpush1.msra.mxu0 0.0
      %499 = vmatprep.subr.mxu0 0.0
      %500 = vmatpush1.msra.mxu0 0.0
      %501 = vmatprep.subr.mxu0 0.0
      %502 = vmatpush1.msra.mxu0 0.0
      %503 = vmatprep.subr.mxu0 0.0
      %504 = vmatpush1.msra.mxu0 0.0
      %505 = vmatprep.subr.mxu0 0.0
      %506 = vmatpush1.msra.mxu0 0.0
      %507 = vmatprep.subr.mxu0 0.0
      %508 = vmatpush1.msra.mxu0 0.0
      %509 = vmatprep.subr.mxu0 0.0
      %510 = vmatpush1.msra.mxu0 0.0
      %511 = vmatprep.subr.mxu0 0.0
      %512 = vmatpush1.msra.mxu0 0.0
      %513 = vmatprep.subr.mxu0 0.0
      %514 = vmatpush1.msra.mxu0 0.0
      %515 = vmatprep.subr.mxu0 0.0
      %516 = vmatpush1.msra.mxu0 0.0
      %517 = vmatprep.subr.mxu0 0.0
      %518 = vmatpush1.msra.mxu0 0.0
      %519 = vmatprep.subr.mxu0 0.0
      %520 = vmatpush1.msra.mxu0 0.0
      %521 = vmatprep.subr.mxu0 0.0
      %522 = vmatpush1.msra.mxu0 0.0
      %523 = vmatprep.subr.mxu0 0.0
      %524 = vmatpush1.msra.mxu0 0.0
      %525 = vmatprep.subr.mxu0 0.0
      %526 = vmatpush1.msra.mxu0 0.0
      %527 = vmatprep.subr.mxu0 0.0
      %528 = vmatpush1.msra.mxu0 0.0
      %529 = vmatprep.subr.mxu0 0.0
      %530 = vmatpush1.msra.mxu0 0.0
      %531 = vmatprep.mubr.f32.mxu0 0.0
      %532 = vmatmul.mubr.f32.gmra.mrb[0].mxu0 %v249
      %v533 = vpop.f32.mrb[0].mxu0
      %v534 = vadd.f32 %v243, %v533
      %v535 = vpop.f32.mrb[0].mxu0
      %536 = vmatprep.mubr.f32.mxu0 0.0
      %537 = vmatmul.mubr.f32.gmra.mrb[0].mxu0 %v252
      %v538 = vpop.f32.mrb[0].mxu0
      %v539 = vadd.f32 %v243, %v538
      %v540 = vpop.f32.mrb[0].mxu0
      %541 = vmatprep.mubr.f32.mxu0 0.0
      %542 = vmatmul.mubr.f32.gmra.mrb[0].mxu0 %v255
      %v543 = vpop.f32.mrb[0].mxu0
      %v544 = vadd.f32 %v243, %v543
      %v545 = vpop.f32.mrb[0].mxu0
      %546 = vmatprep.mubr.f32.mxu0 0.0
      %547 = vmatmul.mubr.f32.gmra.mrb[0].mxu0 %v258
      %v548 = vpop.f32.mrb[0].mxu0
      %v549 = vadd.f32 %v243, %v548
      %v550 = vpop.f32.mrb[0].mxu0
      %551 = vmatprep.mubr.f32.mxu0 0.0
      %552 = vmatmul.mubr.f32.gmra.mrb[0].mxu0 %v261
      %v553 = vpop.f32.mrb[0].mxu0
      %v554 = vadd.f32 %v243, %v553
      %v555 = vpop.f32.mrb[0].mxu0
      %556 = vmatprep.mubr.f32.mxu0 0.0
      %557 = vmatmul.mubr.f32.gmra.mrb[0].mxu0 %v264
      %v558 = vpop.f32.mrb[0].mxu0
      %v559 = vadd.f32 %v243, %v558
      %v560 = vpop.f32.mrb[0].mxu0
      %561 = vmatprep.mubr.f32.mxu0 0.0
      %562 = vmatmul.mubr.f32.gmra.mrb[0].mxu0 %v267
      %v563 = vpop.f32.mrb[0].mxu0
      %v564 = vadd.f32 %v243, %v563
      %v565 = vpop.f32.mrb[0].mxu0
      %566 = vmatprep.mubr.f32.mxu0 0.0
      %567 = vmatmul.mubr.f32.gmra.mrb[0].mxu0 %v270
      %v568 = vpop.f32.mrb[0].mxu0
      %v569 = vadd.f32 %v243, %v568
      %v570 = vpop.f32.mrb[0].mxu0
      %571 = vmatprep.mubr.f32.mxu0 0.0
      %572 = vmatmul.mubr.f32.gmra.mrb[0].mxu0 %v273
      %v573 = vpop.f32.mrb[0].mxu0
      %v574 = vadd.f32 %v243, %v573
      %v575 = vpop.f32.mrb[0].mxu0
      %576 = vmatprep.mubr.f32.mxu0 0.0
      %577 = vmatmul.mubr.f32.gmra.mrb[0].mxu0 %v276
      %v578 = vpop.f32.mrb[0].mxu0
      %v579 = vadd.f32 %v243, %v578
      %v580 = vpop.f32.mrb[0].mxu0
      %581 = vmatprep.mubr.f32.mxu0 0.0
      %582 = vmatmul.mubr.f32.gmra.mrb[0].mxu0 %v279
      %v583 = vpop.f32.mrb[0].mxu0
      %v584 = vadd.f32 %v243, %v583
      %v585 = vpop.f32.mrb[0].mxu0
      %586 = vmatprep.mubr.f32.mxu0 0.0
      %587 = vmatmul.mubr.f32.gmra.mrb[0].mxu0 %v282
      %v588 = vpop.f32.mrb[0].mxu0
      %v589 = vadd.f32 %v243, %v588
      %v590 = vpop.f32.mrb[0].mxu0
      %591 = vmatprep.mubr.f32.mxu0 0.0
      %592 = vmatmul.mubr.f32.gmra.mrb[0].mxu0 %v285
      %v593 = vpop.f32.mrb[0].mxu0
      %v594 = vadd.f32 %v243, %v593
      %v595 = vpop.f32.mrb[0].mxu0
      %596 = vmatprep.mubr.f32.mxu0 0.0
      %597 = vmatmul.mubr.f32.gmra.mrb[0].mxu0 %v288
      %v598 = vpop.f32.mrb[0].mxu0
      %v599 = vadd.f32 %v243, %v598
      %v600 = vpop.f32.mrb[0].mxu0
      %601 = vmatprep.mubr.f32.mxu0 0.0
      %602 = vmatmul.mubr.f32.gmra.mrb[0].mxu0 %v291
      %v603 = vpop.f32.mrb[0].mxu0
      %v604 = vadd.f32 %v243, %v603
      %v605 = vpop.f32.mrb[0].mxu0
      %606 = vmatprep.mubr.f32.mxu0 0.0
      %607 = vmatmul.mubr.f32.gmra.mrb[0].mxu0 %v294
      %v608 = vpop.f32.mrb[0].mxu0
      %v609 = vadd.f32 %v243, %v608
      %v610 = vpop.f32.mrb[0].mxu0
      %611 = vdwg.mxu0
      %v612 = vxor.u32 %v373, 2147483648
      %v613 = vxor.u32 %v379, 2147483648
      %v614 = vxor.u32 %v385, 2147483648
      %v615 = vxor.u32 %v391, 2147483648
      %v616 = vxor.u32 %v397, 2147483648
      %v617 = vxor.u32 %v403, 2147483648
      %v618 = vxor.u32 %v409, 2147483648
      %v619 = vxor.u32 %v415, 2147483648
      %v620 = vxor.u32 %v421, 2147483648
      %v621 = vxor.u32 %v427, 2147483648
      %v622 = vxor.u32 %v433, 2147483648
      %v623 = vxor.u32 %v439, 2147483648
      %v624 = vxor.u32 %v445, 2147483648
      %v625 = vxor.u32 %v451, 2147483648
      %v626 = vxor.u32 %v457, 2147483648
      %v627 = vxor.u32 %v463, 2147483648
      %v628 = vmul.f32 %v612, 1.442695
      %v629 = vpow.pop %v628
      %v630 = vmul.f32 %v613, 1.442695
      %v631 = vpow.pop %v630
      %v632 = vmul.f32 %v614, 1.442695
      %v633 = vpow.pop %v632
      %v634 = vmul.f32 %v615, 1.442695
      %v635 = vpow.pop %v634
      %v636 = vmul.f32 %v616, 1.442695
      %v637 = vpow.pop %v636
      %v638 = vmul.f32 %v617, 1.442695
      %v639 = vpow.pop %v638
      %v640 = vmul.f32 %v618, 1.442695
      %v641 = vpow.pop %v640
      %v642 = vmul.f32 %v619, 1.442695
      %v643 = vpow.pop %v642
      %v644 = vmul.f32 %v620, 1.442695
      %v645 = vpow.pop %v644
      %v646 = vmul.f32 %v621, 1.442695
      %v647 = vpow.pop %v646
      %v648 = vmul.f32 %v622, 1.442695
      %v649 = vpow.pop %v648
      %v650 = vmul.f32 %v623, 1.442695
      %v651 = vpow.pop %v650
      %v652 = vmul.f32 %v624, 1.442695
      %v653 = vpow.pop %v652
      %v654 = vmul.f32 %v625, 1.442695
      %v655 = vpow.pop %v654
      %v656 = vmul.f32 %v626, 1.442695
      %v657 = vpow.pop %v656
      %v658 = vmul.f32 %v627, 1.442695
      %v659 = vpow.pop %v658
      %v660 = vadd.f32 %v629, 1.0
      %v661 = vadd.f32 %v631, 1.0
      %v662 = vadd.f32 %v633, 1.0
      %v663 = vadd.f32 %v635, 1.0
      %v664 = vadd.f32 %v637, 1.0
      %v665 = vadd.f32 %v639, 1.0
      %v666 = vadd.f32 %v641, 1.0
      %v667 = vadd.f32 %v643, 1.0
      %v668 = vadd.f32 %v645, 1.0
      %v669 = vadd.f32 %v647, 1.0
      %v670 = vadd.f32 %v649, 1.0
      %v671 = vadd.f32 %v651, 1.0
      %v672 = vadd.f32 %v653, 1.0
      %v673 = vadd.f32 %v655, 1.0
      %v674 = vadd.f32 %v657, 1.0
      %v675 = vadd.f32 %v659, 1.0
      %v676 = vrcp.pop %v660
      %v677 = vmul.f32 1.0, %v676
      %v678 = vrcp.pop %v661
      %v679 = vmul.f32 1.0, %v678
      %v680 = vrcp.pop %v662
      %v681 = vmul.f32 1.0, %v680
      %v682 = vrcp.pop %v663
      %v683 = vmul.f32 1.0, %v682
      %v684 = vrcp.pop %v664
      %v685 = vmul.f32 1.0, %v684
      %v686 = vrcp.pop %v665
      %v687 = vmul.f32 1.0, %v686
      %v688 = vrcp.pop %v666
      %v689 = vmul.f32 1.0, %v688
      %v690 = vrcp.pop %v667
      %v691 = vmul.f32 1.0, %v690
      %v692 = vrcp.pop %v668
      %v693 = vmul.f32 1.0, %v692
      %v694 = vrcp.pop %v669
      %v695 = vmul.f32 1.0, %v694
      %v696 = vrcp.pop %v670
      %v697 = vmul.f32 1.0, %v696
      %v698 = vrcp.pop %v671
      %v699 = vmul.f32 1.0, %v698
      %v700 = vrcp.pop %v672
      %v701 = vmul.f32 1.0, %v700
      %v702 = vrcp.pop %v673
      %v703 = vmul.f32 1.0, %v702
      %v704 = vrcp.pop %v674
      %v705 = vmul.f32 1.0, %v704
      %v706 = vrcp.pop %v675
      %v707 = vmul.f32 1.0, %v706
      %v708 = vxor.u32 %v375, 2147483648
      %v709 = vxor.u32 %v381, 2147483648
      %v710 = vxor.u32 %v387, 2147483648
      %v711 = vxor.u32 %v393, 2147483648
      %v712 = vxor.u32 %v399, 2147483648
      %v713 = vxor.u32 %v405, 2147483648
      %v714 = vxor.u32 %v411, 2147483648
      %v715 = vxor.u32 %v417, 2147483648
      %v716 = vxor.u32 %v423, 2147483648
      %v717 = vxor.u32 %v429, 2147483648
      %v718 = vxor.u32 %v435, 2147483648
      %v719 = vxor.u32 %v441, 2147483648
      %v720 = vxor.u32 %v447, 2147483648
      %v721 = vxor.u32 %v453, 2147483648
      %v722 = vxor.u32 %v459, 2147483648
      %v723 = vxor.u32 %v465, 2147483648
      %v724 = vmul.f32 %v708, 1.442695
      %v725 = vpow.pop %v724
      %v726 = vmul.f32 %v709, 1.442695
      %v727 = vpow.pop %v726
      %v728 = vmul.f32 %v710, 1.442695
      %v729 = vpow.pop %v728
      %v730 = vmul.f32 %v711, 1.442695
      %v731 = vpow.pop %v730
      %v732 = vmul.f32 %v712, 1.442695
      %v733 = vpow.pop %v732
      %v734 = vmul.f32 %v713, 1.442695
      %v735 = vpow.pop %v734
      %v736 = vmul.f32 %v714, 1.442695
      %v737 = vpow.pop %v736
      %v738 = vmul.f32 %v715, 1.442695
      %v739 = vpow.pop %v738
      %v740 = vmul.f32 %v716, 1.442695
      %v741 = vpow.pop %v740
      %v742 = vmul.f32 %v717, 1.442695
      %v743 = vpow.pop %v742
      %v744 = vmul.f32 %v718, 1.442695
      %v745 = vpow.pop %v744
      %v746 = vmul.f32 %v719, 1.442695
      %v747 = vpow.pop %v746
      %v748 = vmul.f32 %v720, 1.442695
      %v749 = vpow.pop %v748
      %v750 = vmul.f32 %v721, 1.442695
      %v751 = vpow.pop %v750
      %v752 = vmul.f32 %v722, 1.442695
      %v753 = vpow.pop %v752
      %v754 = vmul.f32 %v723, 1.442695
      %v755 = vpow.pop %v754
      %v756 = vadd.f32 %v725, 1.0
      %v757 = vadd.f32 %v727, 1.0
      %v758 = vadd.f32 %v729, 1.0
      %v759 = vadd.f32 %v731, 1.0
      %v760 = vadd.f32 %v733, 1.0
      %v761 = vadd.f32 %v735, 1.0
      %v762 = vadd.f32 %v737, 1.0
      %v763 = vadd.f32 %v739, 1.0
      %v764 = vadd.f32 %v741, 1.0
      %v765 = vadd.f32 %v743, 1.0
      %v766 = vadd.f32 %v745, 1.0
      %v767 = vadd.f32 %v747, 1.0
      %v768 = vadd.f32 %v749, 1.0
      %v769 = vadd.f32 %v751, 1.0
      %v770 = vadd.f32 %v753, 1.0
      %v771 = vadd.f32 %v755, 1.0
      %v772 = vrcp.pop %v756
      %v773 = vmul.f32 1.0, %v772
      %v774 = vrcp.pop %v757
      %v775 = vmul.f32 1.0, %v774
      %v776 = vrcp.pop %v758
      %v777 = vmul.f32 1.0, %v776
      %v778 = vrcp.pop %v759
      %v779 = vmul.f32 1.0, %v778
      %v780 = vrcp.pop %v760
      %v781 = vmul.f32 1.0, %v780
      %v782 = vrcp.pop %v761
      %v783 = vmul.f32 1.0, %v782
      %v784 = vrcp.pop %v762
      %v785 = vmul.f32 1.0, %v784
      %v786 = vrcp.pop %v763
      %v787 = vmul.f32 1.0, %v786
      %v788 = vrcp.pop %v764
      %v789 = vmul.f32 1.0, %v788
      %v790 = vrcp.pop %v765
      %v791 = vmul.f32 1.0, %v790
      %v792 = vrcp.pop %v766
      %v793 = vmul.f32 1.0, %v792
      %v794 = vrcp.pop %v767
      %v795 = vmul.f32 1.0, %v794
      %v796 = vrcp.pop %v768
      %v797 = vmul.f32 1.0, %v796
      %v798 = vrcp.pop %v769
      %v799 = vmul.f32 1.0, %v798
      %v800 = vrcp.pop %v770
      %v801 = vmul.f32 1.0, %v800
      %v802 = vrcp.pop %v771
      %v803 = vmul.f32 1.0, %v802
      %804 = vrot.lane.b32.xlu0 %v198, 124
      %v805 = vpop.permute.xlu0 %804
      %806 = vrot.lane.b32.xlu0 %v199, 124
      %v807 = vpop.permute.xlu0 %806
      %808 = vrot.lane.b32.xlu0 %v200, 124
      %v809 = vpop.permute.xlu0 %808
      %810 = vrot.lane.b32.xlu0 %v201, 124
      %v811 = vpop.permute.xlu0 %810
      %812 = vrot.lane.b32.xlu0 %v202, 124
      %v813 = vpop.permute.xlu0 %812
      %814 = vrot.lane.b32.xlu0 %v203, 124
      %v815 = vpop.permute.xlu0 %814
      %816 = vrot.lane.b32.xlu0 %v204, 124
      %v817 = vpop.permute.xlu0 %816
      %818 = vrot.lane.b32.xlu0 %v205, 124
      %v819 = vpop.permute.xlu0 %818
      %820 = vrot.lane.b32.xlu0 %v206, 124
      %v821 = vpop.permute.xlu0 %820
      %822 = vrot.lane.b32.xlu0 %v207, 124
      %v823 = vpop.permute.xlu0 %822
      %824 = vrot.lane.b32.xlu0 %v208, 124
      %v825 = vpop.permute.xlu0 %824
      %826 = vrot.lane.b32.xlu0 %v209, 124
      %v827 = vpop.permute.xlu0 %826
      %828 = vrot.lane.b32.xlu0 %v210, 124
      %v829 = vpop.permute.xlu0 %828
      %830 = vrot.lane.b32.xlu0 %v211, 124
      %v831 = vpop.permute.xlu0 %830
      %832 = vrot.lane.b32.xlu0 %v212, 124
      %v833 = vpop.permute.xlu0 %832
      %834 = vrot.lane.b32.xlu0 %v213, 124
      %v835 = vpop.permute.xlu0 %834
      %v852 = vmul.f32 %v677, %v805
      %v853 = vmul.f32 %v679, %v807
      %v854 = vmul.f32 %v681, %v809
      %v855 = vmul.f32 %v683, %v811
      %v856 = vmul.f32 %v685, %v813
      %v857 = vmul.f32 %v687, %v815
      %v858 = vmul.f32 %v689, %v817
      %v859 = vmul.f32 %v691, %v819
      %v860 = vmul.f32 %v693, %v821
      %v861 = vmul.f32 %v695, %v823
      %v862 = vmul.f32 %v697, %v825
      %v863 = vmul.f32 %v699, %v827
      %v864 = vmul.f32 %v701, %v829
      %v865 = vmul.f32 %v703, %v831
      %v866 = vmul.f32 %v705, %v833
      %v867 = vmul.f32 %v707, %v835
      %v868 = vld [vmem:[%s1 + $0x78] sm:$0xff]
      %v869 = vld [vmem:[%s1 + $0x90] sm:$0xff]
      %v870 = vld [vmem:[%s1 + $0xa8] sm:$0xff]
      %v871 = vld [vmem:[%s1 + $0xc0] sm:$0xff]
      %vm872 = vcmask 261120
      %v874 = vsel %vm872, %v852, 0
      %v877 = vsel %vm872, %v853, 0
      %v880 = vsel %vm872, %v854, 0
      %v883 = vsel %vm872, %v855, 0
      %v886 = vsel %vm872, %v856, 0
      %v889 = vsel %vm872, %v857, 0
      %v892 = vsel %vm872, %v858, 0
      %v895 = vsel %vm872, %v859, 0
      %v898 = vsel %vm872, %v860, 0
      %v901 = vsel %vm872, %v861, 0
      %v904 = vsel %vm872, %v862, 0
      %v907 = vsel %vm872, %v863, 0
      %v910 = vsel %vm872, %v864, 0
      %v913 = vsel %vm872, %v865, 0
      %v916 = vsel %vm872, %v866, 0
      %v919 = vsel %vm872, %v867, 0
      %921 = vmatprep.subr.mxu0 0.0
      %922 = vmatpush1.msra.mxu0 %v868
      %923 = vmatprep.subr.mxu0 0.0
      %924 = vmatpush1.msra.mxu0 %v869
      %925 = vmatprep.subr.mxu0 0.0
      %926 = vmatpush1.msra.mxu0 %v870
      %927 = vmatprep.subr.mxu0 0.0
      %928 = vmatpush1.msra.mxu0 %v871
      %929 = vmatprep.subr.mxu0 0.0
      %930 = vmatpush1.msra.mxu0 0.0
      %931 = vmatprep.subr.mxu0 0.0
      %932 = vmatpush1.msra.mxu0 0.0
      %933 = vmatprep.subr.mxu0 0.0
      %934 = vmatpush1.msra.mxu0 0.0
      %935 = vmatprep.subr.mxu0 0.0
      %936 = vmatpush1.msra.mxu0 0.0
      %937 = vmatprep.subr.mxu0 0.0
      %938 = vmatpush1.msra.mxu0 0.0
      %939 = vmatprep.subr.mxu0 0.0
      %940 = vmatpush1.msra.mxu0 0.0
      %941 = vmatprep.subr.mxu0 0.0
      %942 = vmatpush1.msra.mxu0 0.0
      %943 = vmatprep.subr.mxu0 0.0
      %944 = vmatpush1.msra.mxu0 0.0
      %945 = vmatprep.subr.mxu0 0.0
      %946 = vmatpush1.msra.mxu0 0.0
      %947 = vmatprep.subr.mxu0 0.0
      %948 = vmatpush1.msra.mxu0 0.0
      %949 = vmatprep.subr.mxu0 0.0
      %950 = vmatpush1.msra.mxu0 0.0
      %951 = vmatprep.subr.mxu0 0.0
      %952 = vmatpush1.msra.mxu0 0.0
      %953 = vmatprep.subr.mxu0 0.0
      %954 = vmatpush1.msra.mxu0 0.0
      %955 = vmatprep.subr.mxu0 0.0
      %956 = vmatpush1.msra.mxu0 0.0
      %957 = vmatprep.subr.mxu0 0.0
      %958 = vmatpush1.msra.mxu0 0.0
      %959 = vmatprep.subr.mxu0 0.0
      %960 = vmatpush1.msra.mxu0 0.0
      %961 = vmatprep.subr.mxu0 0.0
      %962 = vmatpush1.msra.mxu0 0.0
      %963 = vmatprep.subr.mxu0 0.0
      %964 = vmatpush1.msra.mxu0 0.0
      %965 = vmatprep.subr.mxu0 0.0
      %966 = vmatpush1.msra.mxu0 0.0
      %967 = vmatprep.subr.mxu0 0.0
      %968 = vmatpush1.msra.mxu0 0.0
      %969 = vmatprep.subr.mxu0 0.0
      %970 = vmatpush1.msra.mxu0 0.0
      %971 = vmatprep.subr.mxu0 0.0
      %972 = vmatpush1.msra.mxu0 0.0
      %973 = vmatprep.subr.mxu0 0.0
      %974 = vmatpush1.msra.mxu0 0.0
      %975 = vmatprep.subr.mxu0 0.0
      %976 = vmatpush1.msra.mxu0 0.0
      %977 = vmatprep.subr.mxu0 0.0
      %978 = vmatpush1.msra.mxu0 0.0
      %979 = vmatprep.subr.mxu0 0.0
      %980 = vmatpush1.msra.mxu0 0.0
      %981 = vmatprep.subr.mxu0 0.0
      %982 = vmatpush1.msra.mxu0 0.0
      %983 = vmatprep.subr.mxu0 0.0
      %984 = vmatpush1.msra.mxu0 0.0
      %985 = vmatprep.mubr.f32.mxu0 0.0
      %986 = vmatmul.mubr.f32.gmra.mrb[0].mxu0 %v874
      %v987 = vpop.f32.mrb[0].mxu0
      %v988 = vadd.f32 0.0, %v987
      %v989 = vpop.f32.mrb[0].mxu0
      %990 = vmatprep.mubr.f32.mxu0 0.0
      %991 = vmatmul.mubr.f32.gmra.mrb[0].mxu0 %v877
      %v992 = vpop.f32.mrb[0].mxu0
      %v993 = vadd.f32 0.0, %v992
      %v994 = vpop.f32.mrb[0].mxu0
      %995 = vmatprep.mubr.f32.mxu0 0.0
      %996 = vmatmul.mubr.f32.gmra.mrb[0].mxu0 %v880
      %v997 = vpop.f32.mrb[0].mxu0
      %v998 = vadd.f32 0.0, %v997
      %v999 = vpop.f32.mrb[0].mxu0
      %1000 = vmatprep.mubr.f32.mxu0 0.0
      %1001 = vmatmul.mubr.f32.gmra.mrb[0].mxu0 %v883
      %v1002 = vpop.f32.mrb[0].mxu0
      %v1003 = vadd.f32 0.0, %v1002
      %v1004 = vpop.f32.mrb[0].mxu0
      %1005 = vmatprep.mubr.f32.mxu0 0.0
      %1006 = vmatmul.mubr.f32.gmra.mrb[0].mxu0 %v886
      %v1007 = vpop.f32.mrb[0].mxu0
      %v1008 = vadd.f32 0.0, %v1007
      %v1009 = vpop.f32.mrb[0].mxu0
      %1010 = vmatprep.mubr.f32.mxu0 0.0
      %1011 = vmatmul.mubr.f32.gmra.mrb[0].mxu0 %v889
      %v1012 = vpop.f32.mrb[0].mxu0
      %v1013 = vadd.f32 0.0, %v1012
      %v1014 = vpop.f32.mrb[0].mxu0
      %1015 = vmatprep.mubr.f32.mxu0 0.0
      %1016 = vmatmul.mubr.f32.gmra.mrb[0].mxu0 %v892
      %v1017 = vpop.f32.mrb[0].mxu0
      %v1018 = vadd.f32 0.0, %v1017
      %v1019 = vpop.f32.mrb[0].mxu0
      %1020 = vmatprep.mubr.f32.mxu0 0.0
      %1021 = vmatmul.mubr.f32.gmra.mrb[0].mxu0 %v895
      %v1022 = vpop.f32.mrb[0].mxu0
      %v1023 = vadd.f32 0.0, %v1022
      %v1024 = vpop.f32.mrb[0].mxu0
      %1025 = vmatprep.mubr.f32.mxu0 0.0
      %1026 = vmatmul.mubr.f32.gmra.mrb[0].mxu0 %v898
      %v1027 = vpop.f32.mrb[0].mxu0
      %v1028 = vadd.f32 0.0, %v1027
      %v1029 = vpop.f32.mrb[0].mxu0
      %1030 = vmatprep.mubr.f32.mxu0 0.0
      %1031 = vmatmul.mubr.f32.gmra.mrb[0].mxu0 %v901
      %v1032 = vpop.f32.mrb[0].mxu0
      %v1033 = vadd.f32 0.0, %v1032
      %v1034 = vpop.f32.mrb[0].mxu0
      %1035 = vmatprep.mubr.f32.mxu0 0.0
      %1036 = vmatmul.mubr.f32.gmra.mrb[0].mxu0 %v904
      %v1037 = vpop.f32.mrb[0].mxu0
      %v1038 = vadd.f32 0.0, %v1037
      %v1039 = vpop.f32.mrb[0].mxu0
      %1040 = vmatprep.mubr.f32.mxu0 0.0
      %1041 = vmatmul.mubr.f32.gmra.mrb[0].mxu0 %v907
      %v1042 = vpop.f32.mrb[0].mxu0
      %v1043 = vadd.f32 0.0, %v1042
      %v1044 = vpop.f32.mrb[0].mxu0
      %1045 = vmatprep.mubr.f32.mxu0 0.0
      %1046 = vmatmul.mubr.f32.gmra.mrb[0].mxu0 %v910
      %v1047 = vpop.f32.mrb[0].mxu0
      %v1048 = vadd.f32 0.0, %v1047
      %v1049 = vpop.f32.mrb[0].mxu0
      %1050 = vmatprep.mubr.f32.mxu0 0.0
      %1051 = vmatmul.mubr.f32.gmra.mrb[0].mxu0 %v913
      %v1052 = vpop.f32.mrb[0].mxu0
      %v1053 = vadd.f32 0.0, %v1052
      %v1054 = vpop.f32.mrb[0].mxu0
      %1055 = vmatprep.mubr.f32.mxu0 0.0
      %1056 = vmatmul.mubr.f32.gmra.mrb[0].mxu0 %v916
      %v1057 = vpop.f32.mrb[0].mxu0
      %v1058 = vadd.f32 0.0, %v1057
      %v1059 = vpop.f32.mrb[0].mxu0
      %1060 = vmatprep.mubr.f32.mxu0 0.0
      %1061 = vmatmul.mubr.f32.gmra.mrb[0].mxu0 %v919
      %v1062 = vpop.f32.mrb[0].mxu0
      %v1063 = vadd.f32 0.0, %v1062
      %v1064 = vpop.f32.mrb[0].mxu0
      %1065 = vdwg.mxu0
      %v1066 = vadd.f32 %v534, %v988
      %v1067 = vadd.f32 %v539, %v993
      %v1068 = vadd.f32 %v544, %v998
      %v1069 = vadd.f32 %v549, %v1003
      %v1070 = vadd.f32 %v554, %v1008
      %v1071 = vadd.f32 %v559, %v1013
      %v1072 = vadd.f32 %v564, %v1018
      %v1073 = vadd.f32 %v569, %v1023
      %v1074 = vadd.f32 %v574, %v1028
      %v1075 = vadd.f32 %v579, %v1033
      %v1076 = vadd.f32 %v584, %v1038
      %v1077 = vadd.f32 %v589, %v1043
      %v1078 = vadd.f32 %v594, %v1048
      %v1079 = vadd.f32 %v599, %v1053
      %v1080 = vadd.f32 %v604, %v1058
      %v1081 = vadd.f32 %v609, %v1063
      %v1082 = vtanh.pop %v1066
      %v1083 = vtanh.pop %v1067
      %v1084 = vtanh.pop %v1068
      %v1085 = vtanh.pop %v1069
      %v1086 = vtanh.pop %v1070
      %v1087 = vtanh.pop %v1071
      %v1088 = vtanh.pop %v1072
      %v1089 = vtanh.pop %v1073
      %v1090 = vtanh.pop %v1074
      %v1091 = vtanh.pop %v1075
      %v1092 = vtanh.pop %v1076
      %v1093 = vtanh.pop %v1077
      %v1094 = vtanh.pop %v1078
      %v1095 = vtanh.pop %v1079
      %v1096 = vtanh.pop %v1080
      %v1097 = vtanh.pop %v1081
      %v1098 = vsub.f32 1.0, %v773
      %v1099 = vsub.f32 1.0, %v775
      %v1100 = vsub.f32 1.0, %v777
      %v1101 = vsub.f32 1.0, %v779
      %v1102 = vsub.f32 1.0, %v781
      %v1103 = vsub.f32 1.0, %v783
      %v1104 = vsub.f32 1.0, %v785
      %v1105 = vsub.f32 1.0, %v787
      %v1106 = vsub.f32 1.0, %v789
      %v1107 = vsub.f32 1.0, %v791
      %v1108 = vsub.f32 1.0, %v793
      %v1109 = vsub.f32 1.0, %v795
      %v1110 = vsub.f32 1.0, %v797
      %v1111 = vsub.f32 1.0, %v799
      %v1112 = vsub.f32 1.0, %v801
      %v1113 = vsub.f32 1.0, %v803
      %v1114 = vsub.f32 %v1082, %v805
      %v1115 = vsub.f32 %v1083, %v807
      %v1116 = vsub.f32 %v1084, %v809
      %v1117 = vsub.f32 %v1085, %v811
      %v1118 = vsub.f32 %v1086, %v813
      %v1119 = vsub.f32 %v1087, %v815
      %v1120 = vsub.f32 %v1088, %v817
      %v1121 = vsub.f32 %v1089, %v819
      %v1122 = vsub.f32 %v1090, %v821
      %v1123 = vsub.f32 %v1091, %v823
      %v1124 = vsub.f32 %v1092, %v825
      %v1125 = vsub.f32 %v1093, %v827
      %v1126 = vsub.f32 %v1094, %v829
      %v1127 = vsub.f32 %v1095, %v831
      %v1128 = vsub.f32 %v1096, %v833
      %v1129 = vsub.f32 %v1097, %v835
      %v1130 = vmul.f32 %v1098, %v1114
      %v1131 = vmul.f32 %v1099, %v1115
      %v1132 = vmul.f32 %v1100, %v1116
      %v1133 = vmul.f32 %v1101, %v1117
      %v1134 = vmul.f32 %v1102, %v1118
      %v1135 = vmul.f32 %v1103, %v1119
      %v1136 = vmul.f32 %v1104, %v1120
      %v1137 = vmul.f32 %v1105, %v1121
      %v1138 = vmul.f32 %v1106, %v1122
      %v1139 = vmul.f32 %v1107, %v1123
      %v1140 = vmul.f32 %v1108, %v1124
      %v1141 = vmul.f32 %v1109, %v1125
      %v1142 = vmul.f32 %v1110, %v1126
      %v1143 = vmul.f32 %v1111, %v1127
      %v1144 = vmul.f32 %v1112, %v1128
      %v1145 = vmul.f32 %v1113, %v1129
      %1146 = vst.msk [vmem:[%s145] sm:$0xff] %vm872, %v1130
      %1147 = vst.msk [vmem:[%s145 + $0x8] sm:$0xff] %vm872, %v1131
      %1148 = vst.msk [vmem:[%s145 + $0x10] sm:$0xff] %vm872, %v1132
      %1149 = vst.msk [vmem:[%s145 + $0x18] sm:$0xff] %vm872, %v1133
      %1150 = vst.msk [vmem:[%s145 + $0x20] sm:$0xff] %vm872, %v1134
      %1151 = vst.msk [vmem:[%s145 + $0x28] sm:$0xff] %vm872, %v1135
      %1152 = vst.msk [vmem:[%s145 + $0x30] sm:$0xff] %vm872, %v1136
      %1153 = vst.msk [vmem:[%s145 + $0x38] sm:$0xff] %vm872, %v1137
      %1154 = vst.msk [vmem:[%s145 + $0x40] sm:$0xff] %vm872, %v1138
      %1155 = vst.msk [vmem:[%s145 + $0x48] sm:$0xff] %vm872, %v1139
      %1156 = vst.msk [vmem:[%s145 + $0x50] sm:$0xff] %vm872, %v1140
      %1157 = vst.msk [vmem:[%s145 + $0x58] sm:$0xff] %vm872, %v1141
      %1158 = vst.msk [vmem:[%s145 + $0x60] sm:$0xff] %vm872, %v1142
      %1159 = vst.msk [vmem:[%s145 + $0x68] sm:$0xff] %vm872, %v1143
      %1160 = vst.msk [vmem:[%s145 + $0x70] sm:$0xff] %vm872, %v1144
      %1161 = vst.msk [vmem:[%s145 + $0x78] sm:$0xff] %vm872, %v1145
      %s1162 = smul.u32 16, %s13
      %p1163 = scmp.lt.s32.totalorder %s1162, 31
      %s1164 = scalar_select %p1163, %s1162, 31
      %s1165 = smul.addr %s1164, 8
      %s1166 = scalar_lea.vmem %s2, %s1165
      // Predicated region
      $region29: #{tpu_custom_call.1} parent=27 // pred_check
        %p1167 = pneg %p78
      $region30: #{tpu_custom_call.1} parent=27 // pred_check_branch
        %1169 = sbr.rel (%p1167) target = $region32
      $region31: #{tpu_custom_call.1} parent=27 // pred_region
        %s1170 = smul.u32 16, %s13
      $region32: #{tpu_custom_call.1} parent=27 // pred_fallthru
        _
    $region28: #{tpu_custom_call.1} parent=5 // pred_fallthru
      _
    %p1171 = scmp.le.s32.totalorder 2, %s8
    // Predicated region
    $region33: #{tpu_custom_call.1} parent=5 // pred_check
      %p1172 = pneg %p1171
    $region34: #{tpu_custom_call.1} parent=5 // pred_check_branch
      %1174 = sbr.rel (%p1172) target = $region36
    $region35: #{tpu_custom_call.1} parent=5 // pred_region
      %s1175 = ssub.s32 %s8, 2
      // Predicated region
      $region37: #{tpu_custom_call.1} parent=35 // pred_check
        %p1176 = pneg %p84
      $region38: #{tpu_custom_call.1} parent=35 // pred_check_branch
        %1178 = sbr.rel (%p1176) target = $region40
      $region39: #{tpu_custom_call.1} parent=35 // pred_region
        %s1179 = smul.u32 16, %s14
        %p1180 = scmp.lt.s32.totalorder %s1179, 31
        %s1181 = scalar_select %p1180, %s1179, 31
        %s1182 = smul.addr %s1181, 8
        %s1183 = scalar_lea.vmem %s2, %s1182
      $region40: #{tpu_custom_call.1} parent=35 // pred_fallthru
        _
    $region36: #{tpu_custom_call.1} parent=5 // pred_fallthru
      _
  $region6: #{tpu_custom_call.1} parent=0 // loop_footer
    %s12 = sadd.s32 1, %s8
  $region7: #{tpu_custom_call.1} parent=0 // loop_footer_branch
    %7 = sbr.rel target = $region3
  $region8: #{tpu_custom_call.1} parent=0 // loop_exit
    _

</llo_original>
